<compile_context>
chip_gen: v5e
topology: v5e:2x2
jax: 0.10.0
libtpu: 0.0.40
codegen_flags: <defaults>
</compile_context>

<pallas_src>
import jax
import jax.numpy as jnp
from jax.experimental import pallas as pl
from jax.experimental.pallas import tpu as pltpu

_LANE = 128       # f32 lane width
_SUBLANE = 8      # f32 sublane width
_TB_MAX = 2048    # default batch tile (rows); sweep parameter


def _round_up(x, m):
    return (x + m - 1) // m * m


def _shallow_linear_kernel(x_ref, w1_ref, b1_ref, w2_ref, b2_ref, o_ref):
    c = o_ref.shape[-1]
    # lin1: (TB, F) @ (F, Hp) + (1, Hp), ReLU  (f32 accumulate, f32 epilogue).
    h = jnp.dot(x_ref[...], w1_ref[...], preferred_element_type=jnp.float32)
    h = jnp.maximum(h + b1_ref[...], 0.0)
    # lin2: (TB, Hp) @ (Hp, Cp) + (1, Cp) on a full-lane (padded) weight tile.
    z = jnp.dot(h.astype(w2_ref.dtype), w2_ref[...],
                preferred_element_type=jnp.float32)
    z = z + b2_ref[...]
    # Drop the lane padding of the logits before the HBM store (out is (TB, C)).
    z = z[:, :c]
    # Exact sigmoid (approx reciprocal caused the previous accuracy failure).
    o_ref[...] = (1.0 / (1.0 + jnp.exp(-z))).astype(o_ref.dtype)


def prepare_shallow_linear_params(w1, b1, w2, b2, compute_dtype=jnp.float32):
    """Pad parameters once, outside the hot path.

    w1: (F, H); b1: (H,); w2: (H, C); b2: (C,)  (transposed vs torch.nn.Linear
    so the kernel computes y = x @ w + b directly on the MXU).
    compute_dtype=jnp.bfloat16 halves the x HBM read on v5e/v6e; default f32.
    """
    F, H = w1.shape
    C = w2.shape[1]
    Hp = _round_up(H, _LANE)
    Cp = _round_up(C, _LANE)
    w1p = jnp.zeros((F, Hp), compute_dtype).at[:, :H].set(w1.astype(compute_dtype))
    b1p = jnp.zeros((1, Hp), jnp.float32).at[:, :H].set(b1.astype(jnp.float32))
    w2p = jnp.zeros((Hp, Cp), compute_dtype).at[:H, :C].set(w2.astype(compute_dtype))
    b2p = jnp.zeros((1, Cp), jnp.float32).at[:, :C].set(b2.astype(jnp.float32))
    return {"w1p": w1p, "b1p": b1p, "w2p": w2p, "b2p": b2p,
            "F": F, "H": H, "C": C}


def shallow_linear_forward(x, params, *, tb_max=_TB_MAX):
    """x: (..., in_features) -> sigmoid(relu(x @ w1 + b1) @ w2 + b2), shape (B, C)."""
    w1p, b1p, w2p, b2p = params["w1p"], params["b1p"], params["w2p"], params["b2p"]
    F, C = params["F"], params["C"]
    Hp, Cp = w1p.shape[1], w2p.shape[1]

    x = x.reshape(-1, F).astype(w1p.dtype)   # mirrors x.view(-1, in_features)
    B = x.shape[0]

    # Batch tile: multiple of the sublane width, capped at tb_max, and capped
    # at ceil(B/2) so a "parallel" grid has >=2 steps for v7x's 2 TensorCores.
    TB = min(tb_max, max(_SUBLANE, _round_up(-(-B // 2), _SUBLANE)))
    grid = (pl.cdiv(B, TB),)
    # Non-divisible grids are handled without padding x: the last block's OOB
    # rows read unspecified data (row-independent math only) and their output
    # rows are dropped on store.

    x_bytes = x.dtype.itemsize
    w_bytes = w1p.dtype.itemsize
    cost = pl.CostEstimate(
        flops=2 * B * (F * Hp + Hp * Cp),
        transcendentals=B * C,
        bytes_accessed=B * (F * x_bytes + C * 4)
        + (F * Hp + Hp * Cp) * w_bytes + (Hp + Cp) * 4,
    )

    out = pl.pallas_call(
        _shallow_linear_kernel,
        out_shape=jax.ShapeDtypeStruct((B, C), jnp.float32),
        grid=grid,
        in_specs=[
            pl.BlockSpec((TB, F), lambda i: (i, 0)),     # streamed, double-buffered
            pl.BlockSpec((F, Hp), lambda i: (0, 0)),     # VMEM-resident weights
            pl.BlockSpec((1, Hp), lambda i: (0, 0)),
            pl.BlockSpec((Hp, Cp), lambda i: (0, 0)),
            pl.BlockSpec((1, Cp), lambda i: (0, 0)),
        ],
        out_specs=pl.BlockSpec((TB, C), lambda i: (i, 0)),  # unpadded HBM output
        compiler_params=pltpu.CompilerParams(
            dimension_semantics=("parallel",),           # v7x: 2 TCs share grid
        ),
        cost_estimate=cost,
    )(x, w1p, b1p, w2p, b2p)

    return out


def init_shallow_linear_params(key, in_features, size_hidden, n_classes=2):
    """Deterministic init mimicking torch.nn.Linear (U[-1/sqrt(fan_in), ...])."""
    k1, k2, k3, k4 = jax.random.split(key, 4)
    bound1 = 1.0 / jnp.sqrt(jnp.float32(in_features))
    bound2 = 1.0 / jnp.sqrt(jnp.float32(size_hidden))
    w1 = jax.random.uniform(k1, (in_features, size_hidden), jnp.float32,
                            minval=-bound1, maxval=bound1)
    b1 = jax.random.uniform(k2, (size_hidden,), jnp.float32,
                            minval=-bound1, maxval=bound1)
    w2 = jax.random.uniform(k3, (size_hidden, n_classes), jnp.float32,
                            minval=-bound2, maxval=bound2)
    b2 = jax.random.uniform(k4, (n_classes,), jnp.float32,
                            minval=-bound2, maxval=bound2)
    return w1, b1, w2, b2


def _reference(x, w1, b1, w2, b2):
    x = x.reshape(-1, w1.shape[0]).astype(jnp.float32)
    return jax.nn.sigmoid(jnp.maximum(x @ w1 + b1, 0.0) @ w2 + b2)


if __name__ == "__main__":
    in_features = 32
    size_hidden = 64
    n_classes = 2

    key = jax.random.PRNGKey(0)
    kx, kx2, kp = jax.random.split(key, 3)
    w1, b1, w2, b2 = init_shallow_linear_params(kp, in_features, size_hidden, n_classes)
    params = prepare_shallow_linear_params(w1, b1, w2, b2)   # pad once, off hot path

    # Small case: single grid step.
    batch = 8
    x = jax.random.normal(kx, (batch, in_features), jnp.float32)
    out = jax.block_until_ready(shallow_linear_forward(x, params))
    ref = _reference(x, w1, b1, w2, b2)
    assert out.shape == (batch, n_classes)
    assert jnp.allclose(out, ref, atol=2e-3, rtol=2e-3), "mismatch vs reference (small)"

    # Ragged multi-step grid: B=200 with TB=64 -> 4 steps, last block partial.
    batch2 = 200
    x2 = jax.random.normal(kx2, (batch2, in_features), jnp.float32)
    out2 = jax.block_until_ready(shallow_linear_forward(x2, params, tb_max=64))
    ref2 = _reference(x2, w1, b1, w2, b2)
    assert out2.shape == (batch2, n_classes)
    assert jnp.allclose(out2, ref2, atol=2e-3, rtol=2e-3), "mismatch vs reference (grid)"

    print("KERNEL_OK")
</pallas_src>

<mosaic_0001>
module attributes {stable_mosaic.version = 11 : i64} {
  func.func @_shallow_linear_kernel(%arg0: i32, %arg1: memref<8x32xf32, #tpu.memory_space<vmem>>, %arg2: memref<32x128xf32, #tpu.memory_space<vmem>>, %arg3: memref<1x128xf32, #tpu.memory_space<vmem>>, %arg4: memref<128x128xf32, #tpu.memory_space<vmem>>, %arg5: memref<1x128xf32, #tpu.memory_space<vmem>>, %arg6: memref<8x2xf32, #tpu.memory_space<vmem>>) attributes {dimension_semantics = [#tpu.dimension_semantics<parallel>], iteration_bounds = array<i64: 1>, scalar_prefetch = 0 : i64, scratch_operands = 0 : i64, tpu.core_type = #tpu.core_type<tc>, window_params = [{transform_indices = @transform_0, window_bounds = array<i64: 8, 32>}, {pipeline_mode = #tpu.pipeline_mode<synchronous>, transform_indices = @transform_1, window_bounds = array<i64: 32, 128>}, {pipeline_mode = #tpu.pipeline_mode<synchronous>, transform_indices = @transform_2, window_bounds = array<i64: 1, 128>}, {pipeline_mode = #tpu.pipeline_mode<synchronous>, transform_indices = @transform_3, window_bounds = array<i64: 128, 128>}, {pipeline_mode = #tpu.pipeline_mode<synchronous>, transform_indices = @transform_4, window_bounds = array<i64: 1, 128>}, {transform_indices = @transform_5, window_bounds = array<i64: 8, 2>}]} {
    %c0 = arith.constant 0 : index
    %c0_0 = arith.constant 0 : index
    %0 = vector.load %arg1[%c0, %c0_0] : memref<8x32xf32, #tpu.memory_space<vmem>>, vector<8x32xf32>
    %c0_1 = arith.constant 0 : index
    %c0_2 = arith.constant 0 : index
    %1 = vector.load %arg2[%c0_1, %c0_2] : memref<32x128xf32, #tpu.memory_space<vmem>>, vector<32x128xf32>
    %cst = arith.constant dense<0.000000e+00> : vector<8x128xf32>
    %2 = tpu.matmul %0, %1, %cst {dimension_numbers = #tpu.dot_dimension_numbers<[1], [0], [0], [1], [0, 0, 1, 1], [], []>} : vector<8x32xf32>, vector<32x128xf32>, vector<8x128xf32> -> vector<8x128xf32>
    %c0_3 = arith.constant 0 : index
    %c0_4 = arith.constant 0 : index
    %3 = vector.load %arg3[%c0_3, %c0_4] : memref<1x128xf32, #tpu.memory_space<vmem>>, vector<1x128xf32>
    %4 = vector.broadcast %3 : vector<1x128xf32> to vector<8x128xf32>
    %5 = arith.addf %2, %4 : vector<8x128xf32>
    %cst_5 = arith.constant 0.000000e+00 : f32
    %6 = vector.broadcast %cst_5 : f32 to vector<8x128xf32>
    %7 = arith.maximumf %5, %6 : vector<8x128xf32>
    %c0_6 = arith.constant 0 : index
    %c0_7 = arith.constant 0 : index
    %8 = vector.load %arg4[%c0_6, %c0_7] : memref<128x128xf32, #tpu.memory_space<vmem>>, vector<128x128xf32>
    %cst_8 = arith.constant dense<0.000000e+00> : vector<8x128xf32>
    %9 = tpu.matmul %7, %8, %cst_8 {dimension_numbers = #tpu.dot_dimension_numbers<[1], [0], [0], [1], [0, 0, 1, 1], [], []>} : vector<8x128xf32>, vector<128x128xf32>, vector<8x128xf32> -> vector<8x128xf32>
    %c0_9 = arith.constant 0 : index
    %c0_10 = arith.constant 0 : index
    %10 = vector.load %arg5[%c0_9, %c0_10] : memref<1x128xf32, #tpu.memory_space<vmem>>, vector<1x128xf32>
    %11 = vector.broadcast %10 : vector<1x128xf32> to vector<8x128xf32>
    %12 = arith.addf %9, %11 : vector<8x128xf32>
    %13 = vector.extract_strided_slice %12 {offsets = [0, 0], sizes = [8, 2], strides = [1, 1]} : vector<8x128xf32> to vector<8x2xf32>
    %cst_11 = arith.constant 0.000000e+00 : f32
    %14 = vector.broadcast %cst_11 : f32 to vector<8x2xf32>
    %15 = arith.subf %14, %13 : vector<8x2xf32>
    %16 = math.exp %15 : vector<8x2xf32>
    %cst_12 = arith.constant 1.000000e+00 : f32
    %17 = vector.broadcast %cst_12 : f32 to vector<8x2xf32>
    %18 = arith.addf %17, %16 : vector<8x2xf32>
    %cst_13 = arith.constant 1.000000e+00 : f32
    %19 = vector.broadcast %cst_13 : f32 to vector<8x2xf32>
    %20 = arith.divf %19, %18 : vector<8x2xf32>
    %c0_14 = arith.constant 0 : index
    %c0_15 = arith.constant 0 : index
    %21 = vector.load %arg6[%c0_14, %c0_15] : memref<8x2xf32, #tpu.memory_space<vmem>>, vector<8x2xf32>
    tpu.vector_store %arg6[%c0_14, %c0_15], %20 {strides = array<i32>} : memref<8x2xf32, #tpu.memory_space<vmem>>, vector<8x2xf32>,
    return
  }
  func.func @transform_0(%arg0: i32) -> (i32, i32) {
    %c0_i32 = arith.constant 0 : i32
    %c0_i32_0 = arith.constant 0 : i32
    return %arg0, %c0_i32 : i32, i32
  }
  func.func @transform_1(%arg0: i32) -> (i32, i32) {
    %c0_i32 = arith.constant 0 : i32
    %c0_i32_0 = arith.constant 0 : i32
    %c0_i32_1 = arith.constant 0 : i32
    return %c0_i32, %c0_i32_0 : i32, i32
  }
  func.func @transform_2(%arg0: i32) -> (i32, i32) {
    %c0_i32 = arith.constant 0 : i32
    %c0_i32_0 = arith.constant 0 : i32
    %c0_i32_1 = arith.constant 0 : i32
    return %c0_i32, %c0_i32_0 : i32, i32
  }
  func.func @transform_3(%arg0: i32) -> (i32, i32) {
    %c0_i32 = arith.constant 0 : i32
    %c0_i32_0 = arith.constant 0 : i32
    %c0_i32_1 = arith.constant 0 : i32
    return %c0_i32, %c0_i32_0 : i32, i32
  }
  func.func @transform_4(%arg0: i32) -> (i32, i32) {
    %c0_i32 = arith.constant 0 : i32
    %c0_i32_0 = arith.constant 0 : i32
    %c0_i32_1 = arith.constant 0 : i32
    return %c0_i32, %c0_i32_0 : i32, i32
  }
  func.func @transform_5(%arg0: i32) -> (i32, i32) {
    %c0_i32 = arith.constant 0 : i32
    %c0_i32_0 = arith.constant 0 : i32
    return %arg0, %c0_i32 : i32, i32
  }
}

</mosaic_0001>

<llo_original>
// kernel: tpu_custom_call.1
$region0: #{tpu_custom_call.1}
  #allocation0 [shape = 'u32[]', space=smem, size = 0x4, offset = 0x4, fixed_abs, tag = 'smem constant byte address 0x4 - core index']
  #allocation1 [shape = 'u32[72,128]{1,0:T(1,128)}', space=vmem, size = 0x9000, scoped, tag = 'internal scratch']
  %s0 = inlined_call_operand.hbm [shape: f32[8,32], index: 0, kind: input, shape index: {}]
  %s1 = inlined_call_operand.hbm [shape: f32[32,128], index: 1, kind: input, shape index: {}]
  %s2 = inlined_call_operand.vmem [shape: f32[1,128], index: 2, kind: input, shape index: {}]
  %s3 = inlined_call_operand.hbm [shape: f32[128,128], index: 3, kind: input, shape index: {}]
  %s4 = inlined_call_operand.vmem [shape: f32[1,128], index: 4, kind: input, shape index: {}]
  %s5 = inlined_call_operand.vmem [shape: f32[8,2], index: 5, kind: output, shape index: {}]
  %s6 = sld [smem:[#allocation0]]
  $region42: #{tpu_custom_call.1} parent=0
    _
  %s8 = ssub.s32 1, %s6
  %s9 = scalar_select 0, %s8, %s6
  $region1: #{tpu_custom_call.1} parent=0
    #allocation2 [shape = 'u8[4096]{0}', space=vmem, size = 0x1000, scoped, tag = 'input window, operand 0, single buffered']
    #allocation3 [shape = 's32[1]{0}', space=sflag, size = 0x4, scoped, tag = 'scoped memory for tpu_custom_call.1']
    #allocation4 [shape = 'u8[16384]{0}', space=vmem, size = 0x4000, scoped, tag = 'input window, operand 1, single buffered']
    #allocation5 [shape = 's32[1]{0}', space=sflag, size = 0x4, scoped, tag = 'scoped memory for tpu_custom_call.1']
    #allocation6 [shape = 'u8[65536]{0}', space=vmem, size = 0x10000, scoped, tag = 'input window, operand 3, single buffered']
    %10 = vsyncpa [#allocation3], 0
    %11 = vsyncpa [#allocation5], 0
    // Predicated region
    $region2: #{tpu_custom_call.1} parent=1 // pred_check
      _
    $region3: #{tpu_custom_call.1} parent=1 // pred_check_branch
      %13 = sbr.rel (0) target = $region5
    $region4: #{tpu_custom_call.1} parent=1 // pred_region
      %15 = vsyncadd [#allocation3], 0
      %s17 = sshll.u32 %s0, 4
      %s18 = int_to_ptr.hbm [resolvable:$true] %s17
      %s19 = sshll.u32 [#allocation2], 4
      %s20 = int_to_ptr.vmem [resolvable:$true] %s19
      %22 = dma.hbm_to_vmem [thread:$0]  %s18, 128, %s20, [#allocation3]
    $region5: #{tpu_custom_call.1} parent=1 // pred_fallthru
      _
    // Predicated region
    $region6: #{tpu_custom_call.1} parent=1 // pred_check
      _
    $region7: #{tpu_custom_call.1} parent=1 // pred_check_branch
      %24 = sbr.rel (0) target = $region9
    $region8: #{tpu_custom_call.1} parent=1 // pred_region
      %26 = vsyncadd [#allocation5], 0
      %s27 = sshll.u32 %s1, 4
      %s28 = int_to_ptr.hbm [resolvable:$true] %s27
      %s29 = sshll.u32 [#allocation4], 4
      %s30 = int_to_ptr.vmem [resolvable:$true] %s29
      %35 = dma.hbm_to_vmem [thread:$0]  %s28, 512, %s30, [#allocation5], 128, 128, 8
    $region9: #{tpu_custom_call.1} parent=1 // pred_fallthru
      _
    // Predicated region
    $region10: #{tpu_custom_call.1} parent=1 // pred_check
      _
    $region11: #{tpu_custom_call.1} parent=1 // pred_check_branch
      %37 = sbr.rel (0) target = $region13
    $region12: #{tpu_custom_call.1} parent=1 // pred_region
      _
    $region13: #{tpu_custom_call.1} parent=1 // pred_fallthru
      _
    // Predicated region
    $region14: #{tpu_custom_call.1} parent=1 // pred_check
      _
    $region15: #{tpu_custom_call.1} parent=1 // pred_check_branch
      %39 = sbr.rel (0) target = $region17
    $region16: #{tpu_custom_call.1} parent=1 // pred_region
      %41 = vsyncadd [#allocation5], 0
      %s42 = sshll.u32 %s3, 4
      %s43 = int_to_ptr.hbm [resolvable:$true] %s42
      %s44 = sshll.u32 [#allocation6], 4
      %s45 = int_to_ptr.vmem [resolvable:$true] %s44
      %50 = dma.hbm_to_vmem [thread:$0]  %s43, 2048, %s45, [#allocation5], 128, 128, 8
    $region17: #{tpu_custom_call.1} parent=1 // pred_fallthru
      _
    // Predicated region
    $region18: #{tpu_custom_call.1} parent=1 // pred_check
      _
    $region19: #{tpu_custom_call.1} parent=1 // pred_check_branch
      %52 = sbr.rel (0) target = $region21
    $region20: #{tpu_custom_call.1} parent=1 // pred_region
      _
    $region21: #{tpu_custom_call.1} parent=1 // pred_fallthru
      _
    // Predicated region
    $region22: #{tpu_custom_call.1} parent=1 // pred_check
      _
    $region23: #{tpu_custom_call.1} parent=1 // pred_check_branch
      %54 = sbr.rel (0) target = $region25
    $region24: #{tpu_custom_call.1} parent=1 // pred_region
      %56 = dma.done [#allocation3], 128
    $region25: #{tpu_custom_call.1} parent=1 // pred_fallthru
      _
    // Predicated region
    $region26: #{tpu_custom_call.1} parent=1 // pred_check
      _
    $region27: #{tpu_custom_call.1} parent=1 // pred_check_branch
      %58 = sbr.rel (0) target = $region29
    $region28: #{tpu_custom_call.1} parent=1 // pred_region
      %60 = dma.done [#allocation5], 512
    $region29: #{tpu_custom_call.1} parent=1 // pred_fallthru
      _
    // Predicated region
    $region30: #{tpu_custom_call.1} parent=1 // pred_check
      _
    $region31: #{tpu_custom_call.1} parent=1 // pred_check_branch
      %62 = sbr.rel (0) target = $region33
    $region32: #{tpu_custom_call.1} parent=1 // pred_region
      %64 = dma.done [#allocation5], 2048
    $region33: #{tpu_custom_call.1} parent=1 // pred_fallthru
      _
    %v65 = vld [vmem:[#allocation2] sm:$0xff]
    %v66 = vld [vmem:[#allocation4] sm:$0xff]
    %v67 = vld [vmem:[#allocation4 + $0x8] sm:$0xff]
    %v68 = vld [vmem:[#allocation4 + $0x10] sm:$0xff]
    %v69 = vld [vmem:[#allocation4 + $0x18] sm:$0xff]
    %v70 = vld [vmem:[%s2] sm:$0x1]
    %v72 = vperm.slane %v70, 0
    %vm74 = vcmask 261120
    %v76 = vsel %vm74, %v65, 0
    %78 = vmatpush.msra.mxu0 0.0
    %79 = vmatpush.msra.mxu0 0.0
    %80 = vmatpush.msra.mxu0 0.0
    %81 = vmatpush.msra.mxu0 0.0
    %82 = vmatpush.msra.mxu0 0.0
    %83 = vmatpush.msra.mxu0 0.0
    %84 = vmatpush.msra.mxu0 0.0
    %85 = vmatpush.msra.mxu0 0.0
    %86 = vmatpush.msra.mxu0 0.0
    %87 = vmatpush.msra.mxu0 0.0
    %88 = vmatpush.msra.mxu0 0.0
    %89 = vmatpush.msra.mxu0 0.0
    %90 = vmatpush.msra.mxu0 %v69
    %91 = vmatpush.msra.mxu0 %v68
    %92 = vmatpush.msra.mxu0 %v67
    %93 = vmatpush.msra.mxu0 %v66
    %94 = vmatmul.f32.gmra.mxu0 %v76
    %v95 = vpop.f32.mrf.mxu0
    %v96 = vadd.f32 %v72, %v95
    %97 = vdwg.mxu0
    %v98 = vmax.f32 %v96, 0.0
    %v99 = vld [vmem:[#allocation6] sm:$0xff]
    %v100 = vld [vmem:[#allocation6 + $0x8] sm:$0xff]
    %v101 = vld [vmem:[#allocation6 + $0x10] sm:$0xff]
    %v102 = vld [vmem:[#allocation6 + $0x18] sm:$0xff]
    %v103 = vld [vmem:[#allocation6 + $0x20] sm:$0xff]
    %v104 = vld [vmem:[#allocation6 + $0x28] sm:$0xff]
    %v105 = vld [vmem:[#allocation6 + $0x30] sm:$0xff]
    %v106 = vld [vmem:[#allocation6 + $0x38] sm:$0xff]
    %v107 = vld [vmem:[#allocation6 + $0x40] sm:$0xff]
    %v108 = vld [vmem:[#allocation6 + $0x48] sm:$0xff]
    %v109 = vld [vmem:[#allocation6 + $0x50] sm:$0xff]
    %v110 = vld [vmem:[#allocation6 + $0x58] sm:$0xff]
    %v111 = vld [vmem:[#allocation6 + $0x60] sm:$0xff]
    %v112 = vld [vmem:[#allocation6 + $0x68] sm:$0xff]
    %v113 = vld [vmem:[#allocation6 + $0x70] sm:$0xff]
    %v114 = vld [vmem:[#allocation6 + $0x78] sm:$0xff]
    %v115 = vld [vmem:[%s4] sm:$0x1]
    %v117 = vperm.slane %v115, 0
    %119 = vmatpush.msra.mxu0 %v114
    %120 = vmatpush.msra.mxu0 %v113
    %121 = vmatpush.msra.mxu0 %v112
    %122 = vmatpush.msra.mxu0 %v111
    %123 = vmatpush.msra.mxu0 %v110
    %124 = vmatpush.msra.mxu0 %v109
    %125 = vmatpush.msra.mxu0 %v108
    %126 = vmatpush.msra.mxu0 %v107
    %127 = vmatpush.msra.mxu0 %v106
    %128 = vmatpush.msra.mxu0 %v105
    %129 = vmatpush.msra.mxu0 %v104
    %130 = vmatpush.msra.mxu0 %v103
    %131 = vmatpush.msra.mxu0 %v102
    %132 = vmatpush.msra.mxu0 %v101
    %133 = vmatpush.msra.mxu0 %v100
    %134 = vmatpush.msra.mxu0 %v99
    %135 = vmatmul.f32.gmra.mxu0 %v98
    %v136 = vpop.f32.mrf.mxu0
    %v137 = vadd.f32 %v117, %v136
    %138 = vdwg.mxu0
    %v139 = vsub.f32 0.0, %v137
    %v140 = vmul.f32 %v139, 1.442695
    %v141 = vpow.pop %v140
    %v142 = vadd.f32 %v141, 1.0
    %v143 = vrcp.pop %v142
    %v144 = vmul.f32 %v142, %v143
    %v145 = vsub.f32 1.0, %v144
    %v146 = vmul.f32 %v143, %v145
    %v147 = vadd.f32 %v143, %v146
    %vm148 = vweird.f32 %v142
    %vm149 = vweird.f32 %v143
    %vm150 = vmor %vm148, %vm149
    %v151 = vsel %vm150, %v143, %v147
    %v152 = vand.u32 2147483647, %v142
    %vm153 = vcmp.eq.f32.partialorder %v152, 8.507059e+37
    %v154 = vand.u32 %v142, 2147483648
    %v155 = vor.u32 1.1754944e-38, %v154
    %v156 = vsel %vm153, %v155, %v151
    %v157 = vmul.f32 1.0, %v156
    %vm158 = vcmask 15360
    %159 = vst.msk [vmem:[%s5] sm:$0xff] %vm158, %v157
    // Predicated region
    $region34: #{tpu_custom_call.1} parent=1 // pred_check
      _
    $region35: #{tpu_custom_call.1} parent=1 // pred_check_branch
      %161 = sbr.rel (0) target = $region37
    $region36: #{tpu_custom_call.1} parent=1 // pred_region
      _
    $region37: #{tpu_custom_call.1} parent=1 // pred_fallthru
      _
    // Predicated region
    $region38: #{tpu_custom_call.1} parent=1 // pred_check
      _
    $region39: #{tpu_custom_call.1} parent=1 // pred_check_branch
      %163 = sbr.rel (0) target = $region41
    $region40: #{tpu_custom_call.1} parent=1 // pred_region
      _
    $region41: #{tpu_custom_call.1} parent=1 // pred_fallthru
      _
    %164 = vsyncpa [#allocation3], 1
    %165 = vsyncpa [#allocation5], 1

</llo_original>
